<compile_context>
chip_gen: v7x
topology: tpu7x:2x2x1
jax: 0.10.0
libtpu: 0.0.40
codegen_flags: <defaults>
</compile_context>

<pallas_src>
import jax
import jax.numpy as jnp
from jax.experimental import pallas as pl
from jax.experimental.pallas import tpu as pltpu

LN_EPS = 1e-5  # torch.nn.LayerNorm default


def _cdiv(a, b):
    return (a + b - 1) // b


def _round_up(x, m):
    return _cdiv(x, m) * m


def _sublane_multiple(dtype):
    # sub-32-bit dtypes pack along sublanes; keep tiles relayout-free
    return {4: 8, 2: 16, 1: 32}.get(jnp.dtype(dtype).itemsize, 8)


def _layernorm_no_affine(x):
    mu = jnp.mean(x, axis=-1, keepdims=True)
    var = jnp.mean((x - mu) ** 2, axis=-1, keepdims=True)
    return (x - mu) * jax.lax.rsqrt(var + LN_EPS)


def decoder_kernel(z_ref, ids_ref, w_expr_ref, w_cond_ref, w_hid_ref,
                   w_out_ref, b_out_ref, recon_ref, dec_ref):
    tb = z_ref.shape[0]
    n_cond, d_first = w_cond_ref.shape

    ids = ids_ref[...]  # (tb, 1) int32 class ids

    # Condition contribution: 8-way VPU select over w_cond rows. Replaces the
    # pathological K=8 one-hot MXU push (and the wrapper-built one-hot DMA).
    cond = jnp.zeros((tb, d_first), jnp.float32)
    for c in range(n_cond):  # static unroll; n_cond is tiny
        sel = (ids == c).astype(jnp.float32)                          # (tb, 1)
        cond = cond + sel * w_cond_ref[pl.ds(c, 1), :].astype(jnp.float32)

    # --- FirstL: CondLayers(bias=False) -> LayerNorm(no affine) -> ReLU ---
    h = jnp.dot(z_ref[...], w_expr_ref[...],
                preferred_element_type=jnp.float32) + cond
    dec_latent = jnp.maximum(_layernorm_no_affine(h), 0.0)            # f32 math
    dec_ref[...] = dec_latent.astype(dec_ref.dtype)                   # (tb, 64)

    # --- HiddenL: Linear(no bias) -> LayerNorm(no affine) -> ReLU ---
    x = jnp.dot(dec_latent.astype(w_hid_ref.dtype), w_hid_ref[...],
                preferred_element_type=jnp.float32)
    x = jnp.maximum(_layernorm_no_affine(x), 0.0)

    # --- recon_decoder ('mse'): Linear(bias=True) -> ReLU ---
    y = jnp.dot(x.astype(w_out_ref.dtype), w_out_ref[...],
                preferred_element_type=jnp.float32)
    y = y + b_out_ref[...].astype(jnp.float32)
    recon_ref[...] = jnp.maximum(y, 0.0).astype(recon_ref.dtype)


def decoder_forward(z, batch, params, n_classes, *, tile_b=2048, out_dtype=None):
    """z: (B, latent) f32/bf16, batch: (B,) int class ids.
    Returns (recon_x (B, d_out), dec_latent (B, d_first))."""
    w_expr, w_cond, w_hid, w_out, b_out = params
    B, latent = z.shape
    d_first = w_expr.shape[1]
    d_hid = w_hid.shape[1]
    d_out = w_out.shape[1]
    in_dtype = z.dtype
    out_dtype = jnp.dtype(in_dtype if out_dtype is None else out_dtype)

    # Batch tile: big enough to amortize ~0.35us per-grid-step overhead, but
    # capped so the grid keeps >= ~4 steps (v7x megacore sharding) and stays a
    # multiple of the dtype's packed sublane count.
    sub = _sublane_multiple(in_dtype)
    tb = max(sub, min(_round_up(tile_b, sub),
                      _round_up(_cdiv(B, 4), sub),
                      _round_up(B, sub)))
    b_pad = _round_up(B, tb)
    if b_pad != B:
        z = jnp.pad(z, ((0, b_pad - B), (0, 0)))
        batch = jnp.pad(batch, (0, b_pad - B))
    ids = batch.astype(jnp.int32).reshape(b_pad, 1)
    b_out2d = b_out.reshape(1, d_out)

    grid = (b_pad // tb,)

    def tile_spec(feat):
        return pl.BlockSpec((tb, feat), lambda i: (i, 0))

    def resident(shape):  # same block every step -> weights stay in VMEM
        return pl.BlockSpec(shape, lambda i: (0, 0))

    in_itemsize = jnp.dtype(in_dtype).itemsize
    out_itemsize = out_dtype.itemsize
    w_itemsize = jnp.dtype(w_expr.dtype).itemsize
    weight_bytes = ((latent + n_classes) * d_first + d_first * d_hid
                    + d_hid * d_out + d_out) * w_itemsize
    flops = 2 * b_pad * (latent * d_first + d_first * d_hid + d_hid * d_out
                         + n_classes * d_first)
    bytes_accessed = (b_pad * latent * in_itemsize + b_pad * 4 + weight_bytes
                      + b_pad * (d_out + d_first) * out_itemsize)

    # Double-buffered per-step VMEM estimate; only set an explicit limit when
    # it would exceed the tight v5e scoped default (16 MiB).
    per_step_bytes = tb * (latent * in_itemsize + 4
                           + (d_out + d_first) * out_itemsize)
    vmem_est = 2 * (per_step_bytes + weight_bytes) + (1 << 20)
    cp_kwargs = dict(dimension_semantics=("parallel",))
    if vmem_est > (12 << 20):
        cp_kwargs["vmem_limit_bytes"] = int(min(int(1.5 * vmem_est), 48 << 20))

    recon_x, dec_latent = pl.pallas_call(
        decoder_kernel,
        out_shape=(
            jax.ShapeDtypeStruct((b_pad, d_out), out_dtype),
            jax.ShapeDtypeStruct((b_pad, d_first), out_dtype),
        ),
        grid_spec=pltpu.PrefetchScalarGridSpec(
            num_scalar_prefetch=0,
            grid=grid,
            in_specs=[
                tile_spec(latent),               # z
                tile_spec(1),                    # batch ids (int32)
                resident((latent, d_first)),     # w_expr
                resident((n_classes, d_first)),  # w_cond
                resident((d_first, d_hid)),      # w_hid
                resident((d_hid, d_out)),        # w_out
                resident((1, d_out)),            # b_out
            ],
            out_specs=(tile_spec(d_out), tile_spec(d_first)),
        ),
        compiler_params=pltpu.CompilerParams(**cp_kwargs),
        cost_estimate=pl.CostEstimate(
            flops=flops, transcendentals=2 * b_pad,
            bytes_accessed=bytes_accessed),
    )(z, ids, w_expr, w_cond, w_hid, w_out, b_out2d)

    if b_pad != B:  # guarded: no extra HBM round-trip when B divides evenly
        recon_x = recon_x[:B]
        dec_latent = dec_latent[:B]
    return recon_x, dec_latent


def make_params(key, latent_dim, n_classes, layer_sizes, dtype=jnp.float32):
    """Deterministic parameter init. Weights are stored (in, out) so y = x @ W."""
    d1, d2, d3 = layer_sizes
    k = jax.random.split(key, 5)
    scale = 0.1
    w_expr = (scale * jax.random.normal(k[0], (latent_dim, d1), jnp.float32)).astype(dtype)
    w_cond = (scale * jax.random.normal(k[1], (n_classes, d1), jnp.float32)).astype(dtype)
    w_hid = (scale * jax.random.normal(k[2], (d1, d2), jnp.float32)).astype(dtype)
    w_out = (scale * jax.random.normal(k[3], (d2, d3), jnp.float32)).astype(dtype)
    b_out = (scale * jax.random.normal(k[4], (d3,), jnp.float32)).astype(dtype)
    return (w_expr, w_cond, w_hid, w_out, b_out)


def reference_forward(z, batch, params, n_classes):
    """Pure-JAX f32 reference mirroring the torch module."""
    w_expr, w_cond, w_hid, w_out, b_out = [p.astype(jnp.float32) for p in params]
    z = z.astype(jnp.float32)
    onehot = jax.nn.one_hot(batch, n_classes, dtype=jnp.float32)
    h = z @ w_expr + onehot @ w_cond
    dec_latent = jnp.maximum(_layernorm_no_affine(h), 0.0)
    x = jnp.maximum(_layernorm_no_affine(dec_latent @ w_hid), 0.0)
    recon = jnp.maximum(x @ w_out + b_out, 0.0)
    return recon, dec_latent


if __name__ == "__main__":
    latent_dim = 32
    n_classes = 8
    layer_sizes = [64, 128, 256]
    B = 20  # deliberately not a multiple of the tile to exercise padding

    key = jax.random.PRNGKey(0)
    kz, kb, kp = jax.random.split(key, 3)
    z = jax.random.normal(kz, (B, latent_dim), jnp.float32)
    batch = jax.random.randint(kb, (B,), 0, n_classes, jnp.int32)

    ref_recon = None
    ref_dec = None

    # --- f32 path: small tile so the batch grid has several steps (strict check) ---
    params = make_params(kp, latent_dim, n_classes, layer_sizes, jnp.float32)
    recon_x, dec_latent = decoder_forward(z, batch, params, n_classes, tile_b=8)
    jax.block_until_ready((recon_x, dec_latent))

    ref_recon, ref_dec = reference_forward(z, batch, params, n_classes)
    assert recon_x.shape == (B, layer_sizes[-1])
    assert dec_latent.shape == (B, layer_sizes[0])
    assert jnp.allclose(recon_x, ref_recon, atol=1e-5, rtol=1e-5)
    assert jnp.allclose(dec_latent, ref_dec, atol=1e-5, rtol=1e-5)

    # --- f32 compute, bf16 outputs (halves dominant output HBM bytes) ---
    recon_b, dec_b = decoder_forward(z, batch, params, n_classes,
                                     tile_b=8, out_dtype=jnp.bfloat16)
    jax.block_until_ready((recon_b, dec_b))
    assert recon_b.dtype == jnp.bfloat16 and dec_b.dtype == jnp.bfloat16
    assert jnp.allclose(recon_b.astype(jnp.float32), ref_recon, atol=3e-2, rtol=3e-2)
    assert jnp.allclose(dec_b.astype(jnp.float32), ref_dec, atol=3e-2, rtol=3e-2)

    # --- bf16-stream path (memory-bound regime on v6e/v7x; loose tolerance) ---
    params_bf16 = jax.tree.map(lambda p: p.astype(jnp.bfloat16), params)
    recon_bf16, dec_bf16 = decoder_forward(z.astype(jnp.bfloat16), batch,
                                           params_bf16, n_classes, tile_b=8)
    jax.block_until_ready((recon_bf16, dec_bf16))
    assert jnp.allclose(recon_bf16.astype(jnp.float32), ref_recon, atol=1e-1, rtol=1e-1)
    assert jnp.allclose(dec_bf16.astype(jnp.float32), ref_dec, atol=1e-1, rtol=1e-1)

    print("KERNEL_OK")
</pallas_src>

<mosaic_0001>
module attributes {stable_mosaic.version = 11 : i64} {
  func.func @decoder_kernel(%arg0: i32, %arg1: memref<8x32xf32, #tpu.memory_space<vmem>>, %arg2: memref<8x1xi32, #tpu.memory_space<vmem>>, %arg3: memref<32x64xf32, #tpu.memory_space<vmem>>, %arg4: memref<8x64xf32, #tpu.memory_space<vmem>>, %arg5: memref<64x128xf32, #tpu.memory_space<vmem>>, %arg6: memref<128x256xf32, #tpu.memory_space<vmem>>, %arg7: memref<1x256xf32, #tpu.memory_space<vmem>>, %arg8: memref<8x256xf32, #tpu.memory_space<vmem>>, %arg9: memref<8x64xf32, #tpu.memory_space<vmem>>) attributes {dimension_semantics = [#tpu.dimension_semantics<parallel>], iteration_bounds = array<i64: 3>, scalar_prefetch = 0 : i64, scratch_operands = 0 : i64, tpu.core_type = #tpu.core_type<tc>, window_params = [{transform_indices = @transform_0, window_bounds = array<i64: 8, 32>}, {transform_indices = @transform_1, window_bounds = array<i64: 8, 1>}, {pipeline_mode = #tpu.pipeline_mode<synchronous>, transform_indices = @transform_2, window_bounds = array<i64: 32, 64>}, {pipeline_mode = #tpu.pipeline_mode<synchronous>, transform_indices = @transform_3, window_bounds = array<i64: 8, 64>}, {pipeline_mode = #tpu.pipeline_mode<synchronous>, transform_indices = @transform_4, window_bounds = array<i64: 64, 128>}, {pipeline_mode = #tpu.pipeline_mode<synchronous>, transform_indices = @transform_5, window_bounds = array<i64: 128, 256>}, {pipeline_mode = #tpu.pipeline_mode<synchronous>, transform_indices = @transform_6, window_bounds = array<i64: 1, 256>}, {transform_indices = @transform_7, window_bounds = array<i64: 8, 256>}, {transform_indices = @transform_8, window_bounds = array<i64: 8, 64>}]} {
    %c0 = arith.constant 0 : index
    %c0_0 = arith.constant 0 : index
    %0 = vector.load %arg2[%c0, %c0_0] : memref<8x1xi32, #tpu.memory_space<vmem>>, vector<8x1xi32>
    %cst = arith.constant 0.000000e+00 : f32
    %1 = vector.broadcast %cst : f32 to vector<8x64xf32>
    %c0_i32 = arith.constant 0 : i32
    %2 = vector.broadcast %c0_i32 : i32 to vector<8x1xi32>
    %3 = arith.cmpi eq, %0, %2 : vector<8x1xi32>
    %4 = arith.extui %3 : vector<8x1xi1> to vector<8x1xi32>
    %5 = arith.sitofp %4 : vector<8x1xi32> to vector<8x1xf32>
    %c0_1 = arith.constant 0 : index
    %c0_2 = arith.constant 0 : index
    %6 = vector.load %arg4[%c0_1, %c0_2] : memref<8x64xf32, #tpu.memory_space<vmem>>, vector<1x64xf32>
    %7 = vector.broadcast %5 : vector<8x1xf32> to vector<8x64xf32>
    %8 = vector.broadcast %6 : vector<1x64xf32> to vector<8x64xf32>
    %9 = arith.mulf %7, %8 : vector<8x64xf32>
    %10 = arith.addf %1, %9 : vector<8x64xf32>
    %c1_i32 = arith.constant 1 : i32
    %11 = vector.broadcast %c1_i32 : i32 to vector<8x1xi32>
    %12 = arith.cmpi eq, %0, %11 : vector<8x1xi32>
    %13 = arith.extui %12 : vector<8x1xi1> to vector<8x1xi32>
    %14 = arith.sitofp %13 : vector<8x1xi32> to vector<8x1xf32>
    %c1 = arith.constant 1 : index
    %c0_3 = arith.constant 0 : index
    %15 = vector.load %arg4[%c1, %c0_3] : memref<8x64xf32, #tpu.memory_space<vmem>>, vector<1x64xf32>
    %16 = vector.broadcast %14 : vector<8x1xf32> to vector<8x64xf32>
    %17 = vector.broadcast %15 : vector<1x64xf32> to vector<8x64xf32>
    %18 = arith.mulf %16, %17 : vector<8x64xf32>
    %19 = arith.addf %10, %18 : vector<8x64xf32>
    %c2_i32 = arith.constant 2 : i32
    %20 = vector.broadcast %c2_i32 : i32 to vector<8x1xi32>
    %21 = arith.cmpi eq, %0, %20 : vector<8x1xi32>
    %22 = arith.extui %21 : vector<8x1xi1> to vector<8x1xi32>
    %23 = arith.sitofp %22 : vector<8x1xi32> to vector<8x1xf32>
    %c2 = arith.constant 2 : index
    %c0_4 = arith.constant 0 : index
    %24 = vector.load %arg4[%c2, %c0_4] : memref<8x64xf32, #tpu.memory_space<vmem>>, vector<1x64xf32>
    %25 = vector.broadcast %23 : vector<8x1xf32> to vector<8x64xf32>
    %26 = vector.broadcast %24 : vector<1x64xf32> to vector<8x64xf32>
    %27 = arith.mulf %25, %26 : vector<8x64xf32>
    %28 = arith.addf %19, %27 : vector<8x64xf32>
    %c3_i32 = arith.constant 3 : i32
    %29 = vector.broadcast %c3_i32 : i32 to vector<8x1xi32>
    %30 = arith.cmpi eq, %0, %29 : vector<8x1xi32>
    %31 = arith.extui %30 : vector<8x1xi1> to vector<8x1xi32>
    %32 = arith.sitofp %31 : vector<8x1xi32> to vector<8x1xf32>
    %c3 = arith.constant 3 : index
    %c0_5 = arith.constant 0 : index
    %33 = vector.load %arg4[%c3, %c0_5] : memref<8x64xf32, #tpu.memory_space<vmem>>, vector<1x64xf32>
    %34 = vector.broadcast %32 : vector<8x1xf32> to vector<8x64xf32>
    %35 = vector.broadcast %33 : vector<1x64xf32> to vector<8x64xf32>
    %36 = arith.mulf %34, %35 : vector<8x64xf32>
    %37 = arith.addf %28, %36 : vector<8x64xf32>
    %c4_i32 = arith.constant 4 : i32
    %38 = vector.broadcast %c4_i32 : i32 to vector<8x1xi32>
    %39 = arith.cmpi eq, %0, %38 : vector<8x1xi32>
    %40 = arith.extui %39 : vector<8x1xi1> to vector<8x1xi32>
    %41 = arith.sitofp %40 : vector<8x1xi32> to vector<8x1xf32>
    %c4 = arith.constant 4 : index
    %c0_6 = arith.constant 0 : index
    %42 = vector.load %arg4[%c4, %c0_6] : memref<8x64xf32, #tpu.memory_space<vmem>>, vector<1x64xf32>
    %43 = vector.broadcast %41 : vector<8x1xf32> to vector<8x64xf32>
    %44 = vector.broadcast %42 : vector<1x64xf32> to vector<8x64xf32>
    %45 = arith.mulf %43, %44 : vector<8x64xf32>
    %46 = arith.addf %37, %45 : vector<8x64xf32>
    %c5_i32 = arith.constant 5 : i32
    %47 = vector.broadcast %c5_i32 : i32 to vector<8x1xi32>
    %48 = arith.cmpi eq, %0, %47 : vector<8x1xi32>
    %49 = arith.extui %48 : vector<8x1xi1> to vector<8x1xi32>
    %50 = arith.sitofp %49 : vector<8x1xi32> to vector<8x1xf32>
    %c5 = arith.constant 5 : index
    %c0_7 = arith.constant 0 : index
    %51 = vector.load %arg4[%c5, %c0_7] : memref<8x64xf32, #tpu.memory_space<vmem>>, vector<1x64xf32>
    %52 = vector.broadcast %50 : vector<8x1xf32> to vector<8x64xf32>
    %53 = vector.broadcast %51 : vector<1x64xf32> to vector<8x64xf32>
    %54 = arith.mulf %52, %53 : vector<8x64xf32>
    %55 = arith.addf %46, %54 : vector<8x64xf32>
    %c6_i32 = arith.constant 6 : i32
    %56 = vector.broadcast %c6_i32 : i32 to vector<8x1xi32>
    %57 = arith.cmpi eq, %0, %56 : vector<8x1xi32>
    %58 = arith.extui %57 : vector<8x1xi1> to vector<8x1xi32>
    %59 = arith.sitofp %58 : vector<8x1xi32> to vector<8x1xf32>
    %c6 = arith.constant 6 : index
    %c0_8 = arith.constant 0 : index
    %60 = vector.load %arg4[%c6, %c0_8] : memref<8x64xf32, #tpu.memory_space<vmem>>, vector<1x64xf32>
    %61 = vector.broadcast %59 : vector<8x1xf32> to vector<8x64xf32>
    %62 = vector.broadcast %60 : vector<1x64xf32> to vector<8x64xf32>
    %63 = arith.mulf %61, %62 : vector<8x64xf32>
    %64 = arith.addf %55, %63 : vector<8x64xf32>
    %c7_i32 = arith.constant 7 : i32
    %65 = vector.broadcast %c7_i32 : i32 to vector<8x1xi32>
    %66 = arith.cmpi eq, %0, %65 : vector<8x1xi32>
    %67 = arith.extui %66 : vector<8x1xi1> to vector<8x1xi32>
    %68 = arith.sitofp %67 : vector<8x1xi32> to vector<8x1xf32>
    %c7 = arith.constant 7 : index
    %c0_9 = arith.constant 0 : index
    %69 = vector.load %arg4[%c7, %c0_9] : memref<8x64xf32, #tpu.memory_space<vmem>>, vector<1x64xf32>
    %70 = vector.broadcast %68 : vector<8x1xf32> to vector<8x64xf32>
    %71 = vector.broadcast %69 : vector<1x64xf32> to vector<8x64xf32>
    %72 = arith.mulf %70, %71 : vector<8x64xf32>
    %73 = arith.addf %64, %72 : vector<8x64xf32>
    %c0_10 = arith.constant 0 : index
    %c0_11 = arith.constant 0 : index
    %74 = vector.load %arg1[%c0_10, %c0_11] : memref<8x32xf32, #tpu.memory_space<vmem>>, vector<8x32xf32>
    %c0_12 = arith.constant 0 : index
    %c0_13 = arith.constant 0 : index
    %75 = vector.load %arg3[%c0_12, %c0_13] : memref<32x64xf32, #tpu.memory_space<vmem>>, vector<32x64xf32>
    %cst_14 = arith.constant dense<0.000000e+00> : vector<8x64xf32>
    %76 = tpu.matmul %74, %75, %cst_14 {dimension_numbers = #tpu.dot_dimension_numbers<[1], [0], [0], [1], [0, 0, 1, 1], [], []>} : vector<8x32xf32>, vector<32x64xf32>, vector<8x64xf32> -> vector<8x64xf32>
    %77 = arith.addf %76, %73 : vector<8x64xf32>
    %cst_15 = arith.constant dense<0.000000e+00> : vector<8xf32>
    %78 = vector.multi_reduction <add>, %77, %cst_15 [1] : vector<8x64xf32> to vector<8xf32>
    %79 = vector.shape_cast %78 : vector<8xf32> to vector<8x1xf32>
    %cst_16 = arith.constant 6.400000e+01 : f32
    %80 = vector.broadcast %cst_16 : f32 to vector<8x1xf32>
    %81 = arith.divf %79, %80 : vector<8x1xf32>
    %82 = vector.broadcast %81 : vector<8x1xf32> to vector<8x64xf32>
    %83 = arith.subf %77, %82 : vector<8x64xf32>
    %84 = arith.mulf %83, %83 : vector<8x64xf32>
    %cst_17 = arith.constant dense<0.000000e+00> : vector<8xf32>
    %85 = vector.multi_reduction <add>, %84, %cst_17 [1] : vector<8x64xf32> to vector<8xf32>
    %86 = vector.shape_cast %85 : vector<8xf32> to vector<8x1xf32>
    %cst_18 = arith.constant 6.400000e+01 : f32
    %87 = vector.broadcast %cst_18 : f32 to vector<8x1xf32>
    %88 = arith.divf %86, %87 : vector<8x1xf32>
    %89 = vector.broadcast %81 : vector<8x1xf32> to vector<8x64xf32>
    %90 = arith.subf %77, %89 : vector<8x64xf32>
    %cst_19 = arith.constant 9.99999974E-6 : f32
    %91 = vector.broadcast %cst_19 : f32 to vector<8x1xf32>
    %92 = arith.addf %88, %91 : vector<8x1xf32>
    %93 = math.rsqrt %92 : vector<8x1xf32>
    %94 = vector.broadcast %93 : vector<8x1xf32> to vector<8x64xf32>
    %95 = arith.mulf %90, %94 : vector<8x64xf32>
    %cst_20 = arith.constant 0.000000e+00 : f32
    %96 = vector.broadcast %cst_20 : f32 to vector<8x64xf32>
    %97 = arith.maximumf %95, %96 : vector<8x64xf32>
    %c0_21 = arith.constant 0 : index
    %c0_22 = arith.constant 0 : index
    %98 = vector.load %arg9[%c0_21, %c0_22] : memref<8x64xf32, #tpu.memory_space<vmem>>, vector<8x64xf32>
    tpu.vector_store %arg9[%c0_21, %c0_22], %97 {strides = array<i32>} : memref<8x64xf32, #tpu.memory_space<vmem>>, vector<8x64xf32>,
    %c0_23 = arith.constant 0 : index
    %c0_24 = arith.constant 0 : index
    %99 = vector.load %arg5[%c0_23, %c0_24] : memref<64x128xf32, #tpu.memory_space<vmem>>, vector<64x128xf32>
    %cst_25 = arith.constant dense<0.000000e+00> : vector<8x128xf32>
    %100 = tpu.matmul %97, %99, %cst_25 {dimension_numbers = #tpu.dot_dimension_numbers<[1], [0], [0], [1], [0, 0, 1, 1], [], []>} : vector<8x64xf32>, vector<64x128xf32>, vector<8x128xf32> -> vector<8x128xf32>
    %cst_26 = arith.constant dense<0.000000e+00> : vector<8xf32>
    %101 = vector.multi_reduction <add>, %100, %cst_26 [1] : vector<8x128xf32> to vector<8xf32>
    %102 = vector.shape_cast %101 : vector<8xf32> to vector<8x1xf32>
    %cst_27 = arith.constant 1.280000e+02 : f32
    %103 = vector.broadcast %cst_27 : f32 to vector<8x1xf32>
    %104 = arith.divf %102, %103 : vector<8x1xf32>
    %105 = vector.broadcast %104 : vector<8x1xf32> to vector<8x128xf32>
    %106 = arith.subf %100, %105 : vector<8x128xf32>
    %107 = arith.mulf %106, %106 : vector<8x128xf32>
    %cst_28 = arith.constant dense<0.000000e+00> : vector<8xf32>
    %108 = vector.multi_reduction <add>, %107, %cst_28 [1] : vector<8x128xf32> to vector<8xf32>
    %109 = vector.shape_cast %108 : vector<8xf32> to vector<8x1xf32>
    %cst_29 = arith.constant 1.280000e+02 : f32
    %110 = vector.broadcast %cst_29 : f32 to vector<8x1xf32>
    %111 = arith.divf %109, %110 : vector<8x1xf32>
    %112 = vector.broadcast %104 : vector<8x1xf32> to vector<8x128xf32>
    %113 = arith.subf %100, %112 : vector<8x128xf32>
    %cst_30 = arith.constant 9.99999974E-6 : f32
    %114 = vector.broadcast %cst_30 : f32 to vector<8x1xf32>
    %115 = arith.addf %111, %114 : vector<8x1xf32>
    %116 = math.rsqrt %115 : vector<8x1xf32>
    %117 = vector.broadcast %116 : vector<8x1xf32> to vector<8x128xf32>
    %118 = arith.mulf %113, %117 : vector<8x128xf32>
    %cst_31 = arith.constant 0.000000e+00 : f32
    %119 = vector.broadcast %cst_31 : f32 to vector<8x128xf32>
    %120 = arith.maximumf %118, %119 : vector<8x128xf32>
    %c0_32 = arith.constant 0 : index
    %c0_33 = arith.constant 0 : index
    %121 = vector.load %arg6[%c0_32, %c0_33] : memref<128x256xf32, #tpu.memory_space<vmem>>, vector<128x256xf32>
    %cst_34 = arith.constant dense<0.000000e+00> : vector<8x256xf32>
    %122 = tpu.matmul %120, %121, %cst_34 {dimension_numbers = #tpu.dot_dimension_numbers<[1], [0], [0], [1], [0, 0, 1, 1], [], []>} : vector<8x128xf32>, vector<128x256xf32>, vector<8x256xf32> -> vector<8x256xf32>
    %c0_35 = arith.constant 0 : index
    %c0_36 = arith.constant 0 : index
    %123 = vector.load %arg7[%c0_35, %c0_36] : memref<1x256xf32, #tpu.memory_space<vmem>>, vector<1x256xf32>
    %124 = vector.broadcast %123 : vector<1x256xf32> to vector<8x256xf32>
    %125 = arith.addf %122, %124 : vector<8x256xf32>
    %cst_37 = arith.constant 0.000000e+00 : f32
    %126 = vector.broadcast %cst_37 : f32 to vector<8x256xf32>
    %127 = arith.maximumf %125, %126 : vector<8x256xf32>
    %c0_38 = arith.constant 0 : index
    %c0_39 = arith.constant 0 : index
    %128 = vector.load %arg8[%c0_38, %c0_39] : memref<8x256xf32, #tpu.memory_space<vmem>>, vector<8x256xf32>
    tpu.vector_store %arg8[%c0_38, %c0_39], %127 {strides = array<i32>} : memref<8x256xf32, #tpu.memory_space<vmem>>, vector<8x256xf32>,
    return
  }
  func.func @transform_0(%arg0: i32) -> (i32, i32) {
    %c0_i32 = arith.constant 0 : i32
    %c0_i32_0 = arith.constant 0 : i32
    return %arg0, %c0_i32 : i32, i32
  }
  func.func @transform_1(%arg0: i32) -> (i32, i32) {
    %c0_i32 = arith.constant 0 : i32
    %c0_i32_0 = arith.constant 0 : i32
    return %arg0, %c0_i32 : i32, i32
  }
  func.func @transform_2(%arg0: i32) -> (i32, i32) {
    %c0_i32 = arith.constant 0 : i32
    %c0_i32_0 = arith.constant 0 : i32
    %c0_i32_1 = arith.constant 0 : i32
    return %c0_i32, %c0_i32_0 : i32, i32
  }
  func.func @transform_3(%arg0: i32) -> (i32, i32) {
    %c0_i32 = arith.constant 0 : i32
    %c0_i32_0 = arith.constant 0 : i32
    %c0_i32_1 = arith.constant 0 : i32
    return %c0_i32, %c0_i32_0 : i32, i32
  }
  func.func @transform_4(%arg0: i32) -> (i32, i32) {
    %c0_i32 = arith.constant 0 : i32
    %c0_i32_0 = arith.constant 0 : i32
    %c0_i32_1 = arith.constant 0 : i32
    return %c0_i32, %c0_i32_0 : i32, i32
  }
  func.func @transform_5(%arg0: i32) -> (i32, i32) {
    %c0_i32 = arith.constant 0 : i32
    %c0_i32_0 = arith.constant 0 : i32
    %c0_i32_1 = arith.constant 0 : i32
    return %c0_i32, %c0_i32_0 : i32, i32
  }
  func.func @transform_6(%arg0: i32) -> (i32, i32) {
    %c0_i32 = arith.constant 0 : i32
    %c0_i32_0 = arith.constant 0 : i32
    %c0_i32_1 = arith.constant 0 : i32
    return %c0_i32, %c0_i32_0 : i32, i32
  }
  func.func @transform_7(%arg0: i32) -> (i32, i32) {
    %c0_i32 = arith.constant 0 : i32
    %c0_i32_0 = arith.constant 0 : i32
    return %arg0, %c0_i32 : i32, i32
  }
  func.func @transform_8(%arg0: i32) -> (i32, i32) {
    %c0_i32 = arith.constant 0 : i32
    %c0_i32_0 = arith.constant 0 : i32
    return %arg0, %c0_i32 : i32, i32
  }
}

</mosaic_0001>

<llo_original>
// kernel: tpu_custom_call.1
$region0: #{tpu_custom_call.1}
  #allocation0 [shape = 'u32[]', space=smem, size = 0x4, offset = 0x4, fixed_abs, tag = 'smem constant byte address 0x4 - core index']
  #allocation1 [shape = 'u32[144,128]{1,0:T(1,128)}', space=vmem, size = 0x12000, scoped, tag = 'internal scratch']
  %s0 = inlined_call_operand.hbm [shape: f32[24,32], index: 0, kind: input, shape index: {}]
  %s1 = inlined_call_operand.vmem [shape: s32[24,1], index: 1, kind: input, shape index: {}]
  %s2 = inlined_call_operand.vmem [shape: f32[32,64], index: 2, kind: input, shape index: {}]
  %s3 = inlined_call_operand.hbm [shape: f32[8,64], index: 3, kind: input, shape index: {}]
  %s4 = inlined_call_operand.hbm [shape: f32[64,128], index: 4, kind: input, shape index: {}]
  %s5 = inlined_call_operand.hbm [shape: f32[128,256], index: 5, kind: input, shape index: {}]
  %s6 = inlined_call_operand.vmem [shape: f32[1,256], index: 6, kind: input, shape index: {}]
  %s7 = inlined_call_operand.hbm [shape: f32[24,256], index: 7, kind: output, shape index: {0}]
  %s8 = inlined_call_operand.hbm [shape: f32[24,64], index: 8, kind: output, shape index: {1}]
  %9 = xla_tuple %s7, %s8
  %s10 = sld [smem:[#allocation0]]
  $region85: #{tpu_custom_call.1} parent=0
    _
  %s12 = ssub.s32 1, %s10
  %s13 = scalar_select 0, %s12, %s10
  $region1: #{tpu_custom_call.1} parent=0
    #allocation2 [shape = 'u8[8192]{0}', space=vmem, size = 0x2000, scoped, tag = 'input window, operand 0']
    #allocation3 [shape = 's32[2]{0}', space=sflag, size = 0x8, scoped, tag = 'scoped memory for tpu_custom_call.1']
    #allocation4 [shape = 's32[2]{0}', space=sflag, size = 0x8, scoped, tag = 'scoped memory for tpu_custom_call.1']
    #allocation5 [shape = 'u8[4096]{0}', space=vmem, size = 0x1000, scoped, tag = 'input window, operand 3, single buffered']
    #allocation6 [shape = 's32[1]{0}', space=sflag, size = 0x4, scoped, tag = 'scoped memory for tpu_custom_call.1']
    #allocation7 [shape = 'u8[32768]{0}', space=vmem, size = 0x8000, scoped, tag = 'input window, operand 4, single buffered']
    #allocation8 [shape = 'u8[131072]{0}', space=vmem, size = 0x20000, scoped, tag = 'input window, operand 5, single buffered']
    #allocation9 [shape = 's32[1]{0}', space=sflag, size = 0x4, scoped, tag = 'scoped memory for tpu_custom_call.1']
    #allocation10 [shape = 'u8[16384]{0}', space=vmem, size = 0x4000, scoped, tag = 'output window, operand 0']
    #allocation11 [shape = 'u8[8192]{0}', space=vmem, size = 0x2000, scoped, tag = 'output window, operand 1']
    #allocation12 [shape = 's32[2]{0}', space=sflag, size = 0x8, scoped, tag = 'scoped memory for tpu_custom_call.1']
    %14 = vsyncpa [#allocation3], 0
    %s15 = scalar_lea.sflag [#allocation3], 1
    %16 = vsyncpa %s15, 0
    %17 = vsyncpa [#allocation6], 0
    %18 = vsyncpa [#allocation9], 0
    %19 = vsyncpa [#allocation4], 0
    %s20 = scalar_lea.sflag [#allocation4], 1
    %21 = vsyncpa %s20, 0
    %22 = vsyncpa [#allocation12], 0
    %s23 = scalar_lea.sflag [#allocation12], 1
    %24 = vsyncpa %s23, 0
    loop: start=0, step=1, limit=5
    $region2: #{tpu_custom_call.1} parent=1 // loop_pre_header
      _
    $region3: #{tpu_custom_call.1} parent=1 // loop_header
      %s26 = sphi 0, %s30
      %p27 = scmp.ge.s32.totalorder %s26, 5
      %s36 = sphi 0, %s38
      %s39 = sphi 0, %s36
      %s40 = sphi 0, %s39
      %s56 = sphi 0, %s40
      %s62 = sphi 0, %s64
      %s65 = sphi 0, %s62
      %s66 = sphi 0, %s65
      %s82 = sphi 0, %s66
      %s86 = sphi 0, %s86
      %s88 = sphi 0, %s86
      %s89 = sphi 0, %s88
      %s103 = sphi 0, %s89
      %s107 = sphi 0, %s107
      %s109 = sphi 0, %s107
      %s110 = sphi 0, %s109
      %s124 = sphi 0, %s110
      %s128 = sphi 0, %s128
      %s130 = sphi 0, %s128
      %s131 = sphi 0, %s130
      %s145 = sphi 0, %s131
      %s149 = sphi 0, %s149
      %s151 = sphi 0, %s149
      %s152 = sphi 0, %s151
      %s166 = sphi 0, %s152
      %s170 = sphi 0, %s170
      %s172 = sphi 0, %s170
      %s173 = sphi 0, %s172
      %s187 = sphi 0, %s173
      %s193 = sphi 0, %s195
      %s196 = sphi 0, %s193
      %s197 = sphi 0, %s196
      %s213 = sphi 0, %s197
      %s219 = sphi 0, %s221
      %s222 = sphi 0, %s219
      %s223 = sphi 0, %s222
      %s239 = sphi 0, %s223
    $region4: #{tpu_custom_call.1} parent=1 // loop_header_branch
      %29 = sbr.rel (%p27) target = $region8
    $region5: #{tpu_custom_call.1} parent=1 // loop_body
      %s31 = ssub.s32 %s26, 1
      %s32 = ssub.s32 %s26, 2
      %s33 = sadd.s32 %s26, 1
      %s34 = ssub.s32 %s26, %s33
      %p35 = scmp.eq.s32.totalorder %s34, 0
      %s37 = sadd.s32 %s36, 1
      %s38 = scalar_select %p35, %s36, %s37
      %p41 = pneg %p35
      %p42 = scmp.eq.s32.totalorder %s26, 2
      %p43 = por %p41, %p42
      %p44 = scmp.ne.s32.totalorder %s36, %s39
      %p45 = scmp.eq.s32.totalorder %s26, 0
      %p46 = por %p44, %p45
      %p47 = scmp.ne.s32.totalorder %s36, %s39
      %p48 = scmp.eq.s32.totalorder %s31, 2
      %p49 = por %p47, %p48
      %p50 = scmp.ne.s32.totalorder %s39, %s40
      %p51 = scmp.eq.s32.totalorder %s31, 0
      %p52 = por %p50, %p51
      %p53 = scmp.ne.s32.totalorder %s39, %s40
      %p54 = scmp.eq.s32.totalorder %s32, 2
      %p55 = por %p53, %p54
      %p57 = scmp.ne.s32.totalorder %s40, %s56
      %p58 = scmp.eq.s32.totalorder %s32, 0
      %p59 = por %p57, %p58
      %s60 = ssub.s32 %s26, %s33
      %p61 = scmp.eq.s32.totalorder %s60, 0
      %s63 = sadd.s32 %s62, 1
      %s64 = scalar_select %p61, %s62, %s63
      %p67 = pneg %p61
      %p68 = scmp.eq.s32.totalorder %s26, 2
      %p69 = por %p67, %p68
      %p70 = scmp.ne.s32.totalorder %s62, %s65
      %p71 = scmp.eq.s32.totalorder %s26, 0
      %p72 = por %p70, %p71
      %p73 = scmp.ne.s32.totalorder %s62, %s65
      %p74 = scmp.eq.s32.totalorder %s31, 2
      %p75 = por %p73, %p74
      %p76 = scmp.ne.s32.totalorder %s65, %s66
      %p77 = scmp.eq.s32.totalorder %s31, 0
      %p78 = por %p76, %p77
      %p79 = scmp.ne.s32.totalorder %s65, %s66
      %p80 = scmp.eq.s32.totalorder %s32, 2
      %p81 = por %p79, %p80
      %p83 = scmp.ne.s32.totalorder %s66, %s82
      %p84 = scmp.eq.s32.totalorder %s32, 0
      %p85 = por %p83, %p84
      %s87 = sadd.s32 %s86, 1
      %p90 = scmp.eq.s32.totalorder %s26, 2
      %p91 = scmp.ne.s32.totalorder %s86, %s88
      %p92 = scmp.eq.s32.totalorder %s26, 0
      %p93 = por %p91, %p92
      %p94 = scmp.ne.s32.totalorder %s86, %s88
      %p95 = scmp.eq.s32.totalorder %s31, 2
      %p96 = por %p94, %p95
      %p97 = scmp.ne.s32.totalorder %s88, %s89
      %p98 = scmp.eq.s32.totalorder %s31, 0
      %p99 = por %p97, %p98
      %p100 = scmp.ne.s32.totalorder %s88, %s89
      %p101 = scmp.eq.s32.totalorder %s32, 2
      %p102 = por %p100, %p101
      %p104 = scmp.ne.s32.totalorder %s89, %s103
      %p105 = scmp.eq.s32.totalorder %s32, 0
      %p106 = por %p104, %p105
      %s108 = sadd.s32 %s107, 1
      %p111 = scmp.eq.s32.totalorder %s26, 2
      %p112 = scmp.ne.s32.totalorder %s107, %s109
      %p113 = scmp.eq.s32.totalorder %s26, 0
      %p114 = por %p112, %p113
      %p115 = scmp.ne.s32.totalorder %s107, %s109
      %p116 = scmp.eq.s32.totalorder %s31, 2
      %p117 = por %p115, %p116
      %p118 = scmp.ne.s32.totalorder %s109, %s110
      %p119 = scmp.eq.s32.totalorder %s31, 0
      %p120 = por %p118, %p119
      %p121 = scmp.ne.s32.totalorder %s109, %s110
      %p122 = scmp.eq.s32.totalorder %s32, 2
      %p123 = por %p121, %p122
      %p125 = scmp.ne.s32.totalorder %s110, %s124
      %p126 = scmp.eq.s32.totalorder %s32, 0
      %p127 = por %p125, %p126
      %s129 = sadd.s32 %s128, 1
      %p132 = scmp.eq.s32.totalorder %s26, 2
      %p133 = scmp.ne.s32.totalorder %s128, %s130
      %p134 = scmp.eq.s32.totalorder %s26, 0
      %p135 = por %p133, %p134
      %p136 = scmp.ne.s32.totalorder %s128, %s130
      %p137 = scmp.eq.s32.totalorder %s31, 2
      %p138 = por %p136, %p137
      %p139 = scmp.ne.s32.totalorder %s130, %s131
      %p140 = scmp.eq.s32.totalorder %s31, 0
      %p141 = por %p139, %p140
      %p142 = scmp.ne.s32.totalorder %s130, %s131
      %p143 = scmp.eq.s32.totalorder %s32, 2
      %p144 = por %p142, %p143
      %p146 = scmp.ne.s32.totalorder %s131, %s145
      %p147 = scmp.eq.s32.totalorder %s32, 0
      %p148 = por %p146, %p147
      %s150 = sadd.s32 %s149, 1
      %p153 = scmp.eq.s32.totalorder %s26, 2
      %p154 = scmp.ne.s32.totalorder %s149, %s151
      %p155 = scmp.eq.s32.totalorder %s26, 0
      %p156 = por %p154, %p155
      %p157 = scmp.ne.s32.totalorder %s149, %s151
      %p158 = scmp.eq.s32.totalorder %s31, 2
      %p159 = por %p157, %p158
      %p160 = scmp.ne.s32.totalorder %s151, %s152
      %p161 = scmp.eq.s32.totalorder %s31, 0
      %p162 = por %p160, %p161
      %p163 = scmp.ne.s32.totalorder %s151, %s152
      %p164 = scmp.eq.s32.totalorder %s32, 2
      %p165 = por %p163, %p164
      %p167 = scmp.ne.s32.totalorder %s152, %s166
      %p168 = scmp.eq.s32.totalorder %s32, 0
      %p169 = por %p167, %p168
      %s171 = sadd.s32 %s170, 1
      %p174 = scmp.eq.s32.totalorder %s26, 2
      %p175 = scmp.ne.s32.totalorder %s170, %s172
      %p176 = scmp.eq.s32.totalorder %s26, 0
      %p177 = por %p175, %p176
      %p178 = scmp.ne.s32.totalorder %s170, %s172
      %p179 = scmp.eq.s32.totalorder %s31, 2
      %p180 = por %p178, %p179
      %p181 = scmp.ne.s32.totalorder %s172, %s173
      %p182 = scmp.eq.s32.totalorder %s31, 0
      %p183 = por %p181, %p182
      %p184 = scmp.ne.s32.totalorder %s172, %s173
      %p185 = scmp.eq.s32.totalorder %s32, 2
      %p186 = por %p184, %p185
      %p188 = scmp.ne.s32.totalorder %s173, %s187
      %p189 = scmp.eq.s32.totalorder %s32, 0
      %p190 = por %p188, %p189
      %s191 = ssub.s32 %s26, %s33
      %p192 = scmp.eq.s32.totalorder %s191, 0
      %s194 = sadd.s32 %s193, 1
      %s195 = scalar_select %p192, %s193, %s194
      %p198 = pneg %p192
      %p199 = scmp.eq.s32.totalorder %s26, 2
      %p200 = por %p198, %p199
      %p201 = scmp.ne.s32.totalorder %s193, %s196
      %p202 = scmp.eq.s32.totalorder %s26, 0
      %p203 = por %p201, %p202
      %p204 = scmp.ne.s32.totalorder %s193, %s196
      %p205 = scmp.eq.s32.totalorder %s31, 2
      %p206 = por %p204, %p205
      %p207 = scmp.ne.s32.totalorder %s196, %s197
      %p208 = scmp.eq.s32.totalorder %s31, 0
      %p209 = por %p207, %p208
      %p210 = scmp.ne.s32.totalorder %s196, %s197
      %p211 = scmp.eq.s32.totalorder %s32, 2
      %p212 = por %p210, %p211
      %p214 = scmp.ne.s32.totalorder %s197, %s213
      %p215 = scmp.eq.s32.totalorder %s32, 0
      %p216 = por %p214, %p215
      %s217 = ssub.s32 %s26, %s33
      %p218 = scmp.eq.s32.totalorder %s217, 0
      %s220 = sadd.s32 %s219, 1
      %s221 = scalar_select %p218, %s219, %s220
      %p224 = pneg %p218
      %p225 = scmp.eq.s32.totalorder %s26, 2
      %p226 = por %p224, %p225
      %p227 = scmp.ne.s32.totalorder %s219, %s222
      %p228 = scmp.eq.s32.totalorder %s26, 0
      %p229 = por %p227, %p228
      %p230 = scmp.ne.s32.totalorder %s219, %s222
      %p231 = scmp.eq.s32.totalorder %s31, 2
      %p232 = por %p230, %p231
      %p233 = scmp.ne.s32.totalorder %s222, %s223
      %p234 = scmp.eq.s32.totalorder %s31, 0
      %p235 = por %p233, %p234
      %p236 = scmp.ne.s32.totalorder %s222, %s223
      %p237 = scmp.eq.s32.totalorder %s32, 2
      %p238 = por %p236, %p237
      %p240 = scmp.ne.s32.totalorder %s223, %s239
      %p241 = scmp.eq.s32.totalorder %s32, 0
      %p242 = por %p240, %p241
      %p243 = scmp.le.s32.totalorder 1, %s26
      %p244 = scmp.lt.s32.totalorder %s26, 4
      %p245 = pnand %p243, %p244
      %p246 = pneg %p245
      // Predicated region
      $region9: #{tpu_custom_call.1} parent=5 // pred_check
        _
      $region10: #{tpu_custom_call.1} parent=5 // pred_check_branch
        %248 = sbr.rel (%p245) target = $region12
      $region11: #{tpu_custom_call.1} parent=5 // pred_region
        %s249 = ssub.s32 %s26, 1
        // Predicated region
        $region13: #{tpu_custom_call.1} parent=11 // pred_check
          %p250 = pneg %p99
        $region14: #{tpu_custom_call.1} parent=11 // pred_check_branch
          %252 = sbr.rel (%p250) target = $region16
        $region15: #{tpu_custom_call.1} parent=11 // pred_region
          _
        $region16: #{tpu_custom_call.1} parent=11 // pred_fallthru
          _
        // Predicated region
        $region17: #{tpu_custom_call.1} parent=11 // pred_check
          %p253 = pneg %p120
        $region18: #{tpu_custom_call.1} parent=11 // pred_check_branch
          %255 = sbr.rel (%p253) target = $region20
        $region19: #{tpu_custom_call.1} parent=11 // pred_region
          %s257 = ssub.s32 128, 128
          %258 = vsyncadd [#allocation6], %s257
          %s260 = sshll.u32 [#allocation5], 4
          %s261 = int_to_ptr.vmem [resolvable:$true] %s260
          %263 = dma.hbm_to_vmem [thread:$0]  %s3, 128, %s261, [#allocation6]
        $region20: #{tpu_custom_call.1} parent=11 // pred_fallthru
          _
        // Predicated region
        $region21: #{tpu_custom_call.1} parent=11 // pred_check
          %p264 = pneg %p141
        $region22: #{tpu_custom_call.1} parent=11 // pred_check_branch
          %266 = sbr.rel (%p264) target = $region24
        $region23: #{tpu_custom_call.1} parent=11 // pred_region
          %s268 = ssub.s32 1024, 1024
          %269 = vsyncadd [#allocation6], %s268
          %s270 = sshll.u32 [#allocation7], 4
          %s271 = int_to_ptr.vmem [resolvable:$true] %s270
          %276 = dma.hbm_to_vmem [thread:$0]  %s4, 1024, %s271, [#allocation6], 128, 128, 8
        $region24: #{tpu_custom_call.1} parent=11 // pred_fallthru
          _
        // Predicated region
        $region25: #{tpu_custom_call.1} parent=11 // pred_check
          %p277 = pneg %p162
        $region26: #{tpu_custom_call.1} parent=11 // pred_check_branch
          %279 = sbr.rel (%p277) target = $region28
        $region27: #{tpu_custom_call.1} parent=11 // pred_region
          %s281 = ssub.s32 4096, 4096
          %282 = vsyncadd [#allocation9], %s281
          %s283 = sshll.u32 [#allocation8], 4
          %s284 = int_to_ptr.vmem [resolvable:$true] %s283
          %289 = dma.hbm_to_vmem [thread:$0]  %s5, 4096, %s284, [#allocation9], 256, 256, 16
        $region28: #{tpu_custom_call.1} parent=11 // pred_fallthru
          _
        // Predicated region
        $region29: #{tpu_custom_call.1} parent=11 // pred_check
          %p290 = pneg %p183
        $region30: #{tpu_custom_call.1} parent=11 // pred_check_branch
          %292 = sbr.rel (%p290) target = $region32
        $region31: #{tpu_custom_call.1} parent=11 // pred_region
          _
        $region32: #{tpu_custom_call.1} parent=11 // pred_fallthru
          _
      $region12: #{tpu_custom_call.1} parent=5 // pred_fallthru
        _
      %p293 = scmp.lt.s32.totalorder %s26, 3
      // Predicated region
      $region33: #{tpu_custom_call.1} parent=5 // pred_check
        %p294 = pneg %p293
      $region34: #{tpu_custom_call.1} parent=5 // pred_check_branch
        %296 = sbr.rel (%p294) target = $region36
      $region35: #{tpu_custom_call.1} parent=5 // pred_region
        // Predicated region
        $region37: #{tpu_custom_call.1} parent=35 // pred_check
          %p297 = pneg %p46
        $region38: #{tpu_custom_call.1} parent=35 // pred_check_branch
          %299 = sbr.rel (%p297) target = $region40
        $region39: #{tpu_custom_call.1} parent=35 // pred_region
          %s300 = sand.u32 %s36, 1
          %s301 = scalar_lea.sflag [#allocation3], %s300
          %s302 = sand.u32 %s36, 1
          %s303 = smul.addr %s302, 8
          %s304 = scalar_lea.vmem [#allocation2], %s303
          %s306 = ssub.s32 128, 128
          %307 = vsyncadd %s301, %s306
          %s308 = smul.addr %s26, 128
          %s309 = scalar_lea.hbm %s0, %s308
          %s311 = sshll.u32 %s304, 4
          %s312 = int_to_ptr.vmem [resolvable:$true] %s311
          %314 = dma.hbm_to_vmem [thread:$0]  %s309, 128, %s312, %s301
        $region40: #{tpu_custom_call.1} parent=35 // pred_fallthru
          _
        // Predicated region
        $region41: #{tpu_custom_call.1} parent=35 // pred_check
          %p315 = pneg %p72
        $region42: #{tpu_custom_call.1} parent=35 // pred_check_branch
          %317 = sbr.rel (%p315) target = $region44
        $region43: #{tpu_custom_call.1} parent=35 // pred_region
          %p318 = scmp.lt.s32.totalorder %s26, 2
          %s319 = scalar_select %p318, %s26, 2
          %s320 = smul.addr %s319, 8
          %s321 = scalar_lea.vmem %s1, %s320
        $region44: #{tpu_custom_call.1} parent=35 // pred_fallthru
          _
      $region36: #{tpu_custom_call.1} parent=5 // pred_fallthru
        _
      %p322 = scmp.le.s32.totalorder 1, %s26
      %p323 = scmp.lt.s32.totalorder %s26, 4
      %p324 = pnand %p322, %p323
      %p325 = pneg %p324
      // Predicated region
      $region45: #{tpu_custom_call.1} parent=5 // pred_check
        _
      $region46: #{tpu_custom_call.1} parent=5 // pred_check_branch
        %327 = sbr.rel (%p324) target = $region48
      $region47: #{tpu_custom_call.1} parent=5 // pred_region
        %s328 = ssub.s32 %s26, 1
        %s329 = sand.u32 %s39, 1
        %s330 = scalar_lea.sflag [#allocation3], %s329
        %s331 = sand.u32 %s39, 1
        %s332 = smul.addr %s331, 8
        %s333 = scalar_lea.vmem [#allocation2], %s332
        // Predicated region
        $region49: #{tpu_custom_call.1} parent=47 // pred_check
          %p334 = pneg %p52
        $region50: #{tpu_custom_call.1} parent=47 // pred_check_branch
          %336 = sbr.rel (%p334) target = $region52
        $region51: #{tpu_custom_call.1} parent=47 // pred_region
          %337 = dma.done %s330, 128
        $region52: #{tpu_custom_call.1} parent=47 // pred_fallthru
          _
        // Predicated region
        $region53: #{tpu_custom_call.1} parent=47 // pred_check
          %p338 = pneg %p120
        $region54: #{tpu_custom_call.1} parent=47 // pred_check_branch
          %340 = sbr.rel (%p338) target = $region56
        $region55: #{tpu_custom_call.1} parent=47 // pred_region
          %341 = dma.done [#allocation6], 128
        $region56: #{tpu_custom_call.1} parent=47 // pred_fallthru
          _
        // Predicated region
        $region57: #{tpu_custom_call.1} parent=47 // pred_check
          %p342 = pneg %p141
        $region58: #{tpu_custom_call.1} parent=47 // pred_check_branch
          %344 = sbr.rel (%p342) target = $region60
        $region59: #{tpu_custom_call.1} parent=47 // pred_region
          %345 = dma.done [#allocation6], 1024
        $region60: #{tpu_custom_call.1} parent=47 // pred_fallthru
          _
        // Predicated region
        $region61: #{tpu_custom_call.1} parent=47 // pred_check
          %p346 = pneg %p162
        $region62: #{tpu_custom_call.1} parent=47 // pred_check_branch
          %348 = sbr.rel (%p346) target = $region64
        $region63: #{tpu_custom_call.1} parent=47 // pred_region
          %349 = dma.done [#allocation9], 4096
        $region64: #{tpu_custom_call.1} parent=47 // pred_fallthru
          _
        %s350 = sand.u32 %s39, 1
        %s351 = scalar_lea.sflag [#allocation3], %s350
        %s352 = sand.u32 %s39, 1
        %s353 = smul.addr %s352, 8
        %s354 = scalar_lea.vmem [#allocation2], %s353
        %p355 = pneg %p52
        %p356 = pneg %p49
        %p357 = scmp.lt.s32.totalorder %s31, 2
        %s358 = scalar_select %p357, %s31, 2
        %s359 = smul.addr %s358, 8
        %s360 = scalar_lea.vmem %s1, %s359
        %p361 = pneg %p78
        %p362 = pneg %p75
        %p363 = pneg %p99
        %p364 = pneg %p96
        %p365 = pneg %p120
        %p366 = pneg %p117
        %p367 = pneg %p141
        %p368 = pneg %p138
        %p369 = pneg %p162
        %p370 = pneg %p159
        %p371 = pneg %p183
        %p372 = pneg %p180
        %p373 = pneg %p209
        %p374 = pneg %p206
        %s375 = sand.u32 %s196, 1
        %s376 = scalar_lea.sflag [#allocation4], %s375
        %s377 = sand.u32 %s196, 1
        %s378 = smul.addr %s377, 16
        %s379 = scalar_lea.vmem [#allocation10], %s378
        %p380 = pneg %p235
        %p381 = pneg %p232
        %s382 = sand.u32 %s222, 1
        %s383 = scalar_lea.sflag [#allocation12], %s382
        %s384 = sand.u32 %s222, 1
        %s385 = smul.addr %s384, 8
        %s386 = scalar_lea.vmem [#allocation11], %s385
        %p387 = scmp.lt.s32.totalorder %s31, 2
        %s388 = scalar_select %p387, %s31, 2
        %s389 = smul.addr %s388, 8
        %s390 = scalar_lea.vmem %s1, %s389
        %v391 = vld [vmem:[%s390] sm:$0xff]
        %vm392 = vcmp.eq.s32.totalorder %v391, 0
        %v393 = vsel %vm392, 1, 0
        %v394 = vcvt.s32.f32 %v393
        %v395 = vld [vmem:[#allocation5] sm:$0x1]
        %397 = vset.pattern.permute.xlu0 0
        %398 = vperm.xlu0 %397, %v394
        %v399 = vpop.permute.xlu0 %398
        %v401 = vlaneseq
        %v402 = vshrl.u32 %v401, 7
        %v403 = vsub.s32 0, %v402
        %v404 = vrot.slane %v395, %v403
        %v405 = vmul.f32 %v399, %v404
        %v406 = vadd.f32 %v405, 0.0
        %vm407 = vcmp.eq.s32.totalorder %v391, 1
        %v408 = vsel %vm407, 1, 0
        %v409 = vcvt.s32.f32 %v408
        %v410 = vld [vmem:[#allocation5 + $0x1] sm:$0x1]
        %412 = vset.pattern.permute.xlu0 0
        %413 = vperm.xlu0 %412, %v409
        %v414 = vpop.permute.xlu0 %413
        %v416 = vlaneseq
        %v417 = vshrl.u32 %v416, 7
        %v418 = vsub.s32 0, %v417
        %v419 = vrot.slane %v410, %v418
        %v420 = vmul.f32 %v414, %v419
        %v421 = vadd.f32 %v406, %v420
        %vm422 = vcmp.eq.s32.totalorder %v391, 2
        %v423 = vsel %vm422, 1, 0
        %v424 = vcvt.s32.f32 %v423
        %v425 = vld [vmem:[#allocation5 + $0x2] sm:$0x1]
        %427 = vset.pattern.permute.xlu0 0
        %428 = vperm.xlu0 %427, %v424
        %v429 = vpop.permute.xlu0 %428
        %v431 = vlaneseq
        %v432 = vshrl.u32 %v431, 7
        %v433 = vsub.s32 0, %v432
        %v434 = vrot.slane %v425, %v433
        %v435 = vmul.f32 %v429, %v434
        %v436 = vadd.f32 %v421, %v435
        %vm437 = vcmp.eq.s32.totalorder %v391, 3
        %v438 = vsel %vm437, 1, 0
        %v439 = vcvt.s32.f32 %v438
        %v440 = vld [vmem:[#allocation5 + $0x3] sm:$0x1]
        %442 = vset.pattern.permute.xlu0 0
        %443 = vperm.xlu0 %442, %v439
        %v444 = vpop.permute.xlu0 %443
        %v446 = vlaneseq
        %v447 = vshrl.u32 %v446, 7
        %v448 = vsub.s32 0, %v447
        %v449 = vrot.slane %v440, %v448
        %v450 = vmul.f32 %v444, %v449
        %v451 = vadd.f32 %v436, %v450
        %vm452 = vcmp.eq.s32.totalorder %v391, 4
        %v453 = vsel %vm452, 1, 0
        %v454 = vcvt.s32.f32 %v453
        %v455 = vld [vmem:[#allocation5 + $0x4] sm:$0x1]
        %457 = vset.pattern.permute.xlu0 0
        %458 = vperm.xlu0 %457, %v454
        %v459 = vpop.permute.xlu0 %458
        %v461 = vlaneseq
        %v462 = vshrl.u32 %v461, 7
        %v463 = vsub.s32 0, %v462
        %v464 = vrot.slane %v455, %v463
        %v465 = vmul.f32 %v459, %v464
        %v466 = vadd.f32 %v451, %v465
        %vm467 = vcmp.eq.s32.totalorder %v391, 5
        %v468 = vsel %vm467, 1, 0
        %v469 = vcvt.s32.f32 %v468
        %v470 = vld [vmem:[#allocation5 + $0x5] sm:$0x1]
        %472 = vset.pattern.permute.xlu0 0
        %473 = vperm.xlu0 %472, %v469
        %v474 = vpop.permute.xlu0 %473
        %v476 = vlaneseq
        %v477 = vshrl.u32 %v476, 7
        %v478 = vsub.s32 0, %v477
        %v479 = vrot.slane %v470, %v478
        %v480 = vmul.f32 %v474, %v479
        %v481 = vadd.f32 %v466, %v480
        %vm482 = vcmp.eq.s32.totalorder %v391, 6
        %v483 = vsel %vm482, 1, 0
        %v484 = vcvt.s32.f32 %v483
        %v485 = vld [vmem:[#allocation5 + $0x6] sm:$0x1]
        %487 = vset.pattern.permute.xlu0 0
        %488 = vperm.xlu0 %487, %v484
        %v489 = vpop.permute.xlu0 %488
        %v491 = vlaneseq
        %v492 = vshrl.u32 %v491, 7
        %v493 = vsub.s32 0, %v492
        %v494 = vrot.slane %v485, %v493
        %v495 = vmul.f32 %v489, %v494
        %v496 = vadd.f32 %v481, %v495
        %vm497 = vcmp.eq.s32.totalorder %v391, 7
        %v498 = vsel %vm497, 1, 0
        %v499 = vcvt.s32.f32 %v498
        %v500 = vld [vmem:[#allocation5 + $0x7] sm:$0x1]
        %502 = vset.pattern.permute.xlu0 0
        %503 = vperm.xlu0 %502, %v499
        %v504 = vpop.permute.xlu0 %503
        %v506 = vlaneseq
        %v507 = vshrl.u32 %v506, 7
        %v508 = vsub.s32 0, %v507
        %v509 = vrot.slane %v500, %v508
        %v510 = vmul.f32 %v504, %v509
        %v511 = vadd.f32 %v496, %v510
        %v512 = vld [vmem:[%s333] sm:$0xff]
        %v513 = vld [vmem:[%s2] sm:$0xff]
        %v514 = vld [vmem:[%s2 + $0x8] sm:$0xff]
        %v515 = vld [vmem:[%s2 + $0x10] sm:$0xff]
        %v516 = vld [vmem:[%s2 + $0x18] sm:$0xff]
        %vm517 = vcmask 261120
        %v519 = vsel %vm517, %v512, 0
        %521 = vmatprep.subr.mxu0 0.0
        %522 = vmatpush1.msra.mxu0 %v513
        %523 = vmatprep.subr.mxu0 0.0
        %524 = vmatpush1.msra.mxu0 %v514
        %525 = vmatprep.subr.mxu0 0.0
        %526 = vmatpush1.msra.mxu0 %v515
        %527 = vmatprep.subr.mxu0 0.0
        %528 = vmatpush1.msra.mxu0 %v516
        %529 = vmatprep.subr.mxu0 0.0
        %530 = vmatpush1.msra.mxu0 0.0
        %531 = vmatprep.subr.mxu0 0.0
        %532 = vmatpush1.msra.mxu0 0.0
        %533 = vmatprep.subr.mxu0 0.0
        %534 = vmatpush1.msra.mxu0 0.0
        %535 = vmatprep.subr.mxu0 0.0
        %536 = vmatpush1.msra.mxu0 0.0
        %537 = vmatprep.subr.mxu0 0.0
        %538 = vmatpush1.msra.mxu0 0.0
        %539 = vmatprep.subr.mxu0 0.0
        %540 = vmatpush1.msra.mxu0 0.0
        %541 = vmatprep.subr.mxu0 0.0
        %542 = vmatpush1.msra.mxu0 0.0
        %543 = vmatprep.subr.mxu0 0.0
        %544 = vmatpush1.msra.mxu0 0.0
        %545 = vmatprep.subr.mxu0 0.0
        %546 = vmatpush1.msra.mxu0 0.0
        %547 = vmatprep.subr.mxu0 0.0
        %548 = vmatpush1.msra.mxu0 0.0
        %549 = vmatprep.subr.mxu0 0.0
        %550 = vmatpush1.msra.mxu0 0.0
        %551 = vmatprep.subr.mxu0 0.0
        %552 = vmatpush1.msra.mxu0 0.0
        %553 = vmatprep.subr.mxu0 0.0
        %554 = vmatpush1.msra.mxu0 0.0
        %555 = vmatprep.subr.mxu0 0.0
        %556 = vmatpush1.msra.mxu0 0.0
        %557 = vmatprep.subr.mxu0 0.0
        %558 = vmatpush1.msra.mxu0 0.0
        %559 = vmatprep.subr.mxu0 0.0
        %560 = vmatpush1.msra.mxu0 0.0
        %561 = vmatprep.subr.mxu0 0.0
        %562 = vmatpush1.msra.mxu0 0.0
        %563 = vmatprep.subr.mxu0 0.0
        %564 = vmatpush1.msra.mxu0 0.0
        %565 = vmatprep.subr.mxu0 0.0
        %566 = vmatpush1.msra.mxu0 0.0
        %567 = vmatprep.subr.mxu0 0.0
        %568 = vmatpush1.msra.mxu0 0.0
        %569 = vmatprep.subr.mxu0 0.0
        %570 = vmatpush1.msra.mxu0 0.0
        %571 = vmatprep.subr.mxu0 0.0
        %572 = vmatpush1.msra.mxu0 0.0
        %573 = vmatprep.subr.mxu0 0.0
        %574 = vmatpush1.msra.mxu0 0.0
        %575 = vmatprep.subr.mxu0 0.0
        %576 = vmatpush1.msra.mxu0 0.0
        %577 = vmatprep.subr.mxu0 0.0
        %578 = vmatpush1.msra.mxu0 0.0
        %579 = vmatprep.subr.mxu0 0.0
        %580 = vmatpush1.msra.mxu0 0.0
        %581 = vmatprep.subr.mxu0 0.0
        %582 = vmatpush1.msra.mxu0 0.0
        %583 = vmatprep.subr.mxu0 0.0
        %584 = vmatpush1.msra.mxu0 0.0
        %585 = vmatprep.mubr.f32.mxu0 0.0
        %586 = vmatmul.mubr.f32.gmra.mrb[0].mxu0 %v519
        %v587 = vpop.f32.mrb[0].mxu0
        %v588 = vadd.f32 %v511, %v587
        %v589 = vpop.f32.mrb[0].mxu0
        %590 = vdwg.mxu0
        %vm591 = vcmask 523264
        %v592 = vsel %vm591, %v588, 0.0
        %593 = vadd.xlane.f32.xlu0 %v592
        %v594 = vpop.xlane.xlu0 %593
        %v595 = vrcp.pop 64.0
        %v596 = vmul.f32 %v594, %v595
        %v597 = vsub.f32 %v588, %v596
        %v598 = vmul.f32 %v597, %v597
        %v599 = vsel %vm591, %v598, 0.0
        %600 = vadd.xlane.f32.xlu0 %v599
        %v601 = vpop.xlane.xlu0 %600
        %v602 = vmul.f32 %v601, %v595
        %v603 = vadd.f32 %v602, 1e-05
        %v604 = vrsqrt.pop %v603
        %v605 = vmul.f32 %v597, %v604
        %v606 = vmax.f32 %v605, 0.0
        %607 = vst.msk [vmem:[%s386] sm:$0xff] %vm591, %v606
        %v608 = vld [vmem:[#allocation7] sm:$0xff]
        %v609 = vld [vmem:[#allocation7 + $0x8] sm:$0xff]
        %v610 = vld [vmem:[#allocation7 + $0x10] sm:$0xff]
        %v611 = vld [vmem:[#allocation7 + $0x18] sm:$0xff]
        %v612 = vld [vmem:[#allocation7 + $0x20] sm:$0xff]
        %v613 = vld [vmem:[#allocation7 + $0x28] sm:$0xff]
        %v614 = vld [vmem:[#allocation7 + $0x30] sm:$0xff]
        %v615 = vld [vmem:[#allocation7 + $0x38] sm:$0xff]
        %v617 = vsel %vm591, %v606, 0
        %619 = vmatprep.subr.mxu0 0.0
        %620 = vmatpush1.msra.mxu0 %v608
        %621 = vmatprep.subr.mxu0 0.0
        %622 = vmatpush1.msra.mxu0 %v609
        %623 = vmatprep.subr.mxu0 0.0
        %624 = vmatpush1.msra.mxu0 %v610
        %625 = vmatprep.subr.mxu0 0.0
        %626 = vmatpush1.msra.mxu0 %v611
        %627 = vmatprep.subr.mxu0 0.0
        %628 = vmatpush1.msra.mxu0 %v612
        %629 = vmatprep.subr.mxu0 0.0
        %630 = vmatpush1.msra.mxu0 %v613
        %631 = vmatprep.subr.mxu0 0.0
        %632 = vmatpush1.msra.mxu0 %v614
        %633 = vmatprep.subr.mxu0 0.0
        %634 = vmatpush1.msra.mxu0 %v615
        %635 = vmatprep.subr.mxu0 0.0
        %636 = vmatpush1.msra.mxu0 0.0
        %637 = vmatprep.subr.mxu0 0.0
        %638 = vmatpush1.msra.mxu0 0.0
        %639 = vmatprep.subr.mxu0 0.0
        %640 = vmatpush1.msra.mxu0 0.0
        %641 = vmatprep.subr.mxu0 0.0
        %642 = vmatpush1.msra.mxu0 0.0
        %643 = vmatprep.subr.mxu0 0.0
        %644 = vmatpush1.msra.mxu0 0.0
        %645 = vmatprep.subr.mxu0 0.0
        %646 = vmatpush1.msra.mxu0 0.0
        %647 = vmatprep.subr.mxu0 0.0
        %648 = vmatpush1.msra.mxu0 0.0
        %649 = vmatprep.subr.mxu0 0.0
        %650 = vmatpush1.msra.mxu0 0.0
        %651 = vmatprep.subr.mxu0 0.0
        %652 = vmatpush1.msra.mxu0 0.0
        %653 = vmatprep.subr.mxu0 0.0
        %654 = vmatpush1.msra.mxu0 0.0
        %655 = vmatprep.subr.mxu0 0.0
        %656 = vmatpush1.msra.mxu0 0.0
        %657 = vmatprep.subr.mxu0 0.0
        %658 = vmatpush1.msra.mxu0 0.0
        %659 = vmatprep.subr.mxu0 0.0
        %660 = vmatpush1.msra.mxu0 0.0
        %661 = vmatprep.subr.mxu0 0.0
        %662 = vmatpush1.msra.mxu0 0.0
        %663 = vmatprep.subr.mxu0 0.0
        %664 = vmatpush1.msra.mxu0 0.0
        %665 = vmatprep.subr.mxu0 0.0
        %666 = vmatpush1.msra.mxu0 0.0
        %667 = vmatprep.subr.mxu0 0.0
        %668 = vmatpush1.msra.mxu0 0.0
        %669 = vmatprep.subr.mxu0 0.0
        %670 = vmatpush1.msra.mxu0 0.0
        %671 = vmatprep.subr.mxu0 0.0
        %672 = vmatpush1.msra.mxu0 0.0
        %673 = vmatprep.subr.mxu0 0.0
        %674 = vmatpush1.msra.mxu0 0.0
        %675 = vmatprep.subr.mxu0 0.0
        %676 = vmatpush1.msra.mxu0 0.0
        %677 = vmatprep.subr.mxu0 0.0
        %678 = vmatpush1.msra.mxu0 0.0
        %679 = vmatprep.subr.mxu0 0.0
        %680 = vmatpush1.msra.mxu0 0.0
        %681 = vmatprep.subr.mxu0 0.0
        %682 = vmatpush1.msra.mxu0 0.0
        %683 = vmatprep.mubr.f32.mxu0 0.0
        %684 = vmatmul.mubr.f32.gmra.mrb[0].mxu0 %v617
        %v685 = vpop.f32.mrb[0].mxu0
        %v686 = vadd.f32 0.0, %v685
        %v687 = vpop.f32.mrb[0].mxu0
        %688 = vdwg.mxu0
        %689 = vadd.xlane.f32.xlu0 %v686
        %v690 = vpop.xlane.xlu0 %689
        %v691 = vrcp.pop 128.0
        %v692 = vmul.f32 %v690, %v691
        %v693 = vsub.f32 %v686, %v692
        %v694 = vmul.f32 %v693, %v693
        %695 = vadd.xlane.f32.xlu0 %v694
        %v696 = vpop.xlane.xlu0 %695
        %v697 = vmul.f32 %v696, %v691
        %v698 = vadd.f32 %v697, 1e-05
        %v699 = vrsqrt.pop %v698
        %v700 = vmul.f32 %v693, %v699
        %v701 = vmax.f32 %v700, 0.0
        %v702 = vld [vmem:[#allocation8] sm:$0xff]
        %v703 = vld [vmem:[#allocation8 + $0x8] sm:$0xff]
        %v704 = vld [vmem:[#allocation8 + $0x10] sm:$0xff]
        %v705 = vld [vmem:[#allocation8 + $0x18] sm:$0xff]
        %v706 = vld [vmem:[#allocation8 + $0x20] sm:$0xff]
        %v707 = vld [vmem:[#allocation8 + $0x28] sm:$0xff]
        %v708 = vld [vmem:[#allocation8 + $0x30] sm:$0xff]
        %v709 = vld [vmem:[#allocation8 + $0x38] sm:$0xff]
        %v710 = vld [vmem:[#allocation8 + $0x40] sm:$0xff]
        %v711 = vld [vmem:[#allocation8 + $0x48] sm:$0xff]
        %v712 = vld [vmem:[#allocation8 + $0x50] sm:$0xff]
        %v713 = vld [vmem:[#allocation8 + $0x58] sm:$0xff]
        %v714 = vld [vmem:[#allocation8 + $0x60] sm:$0xff]
        %v715 = vld [vmem:[#allocation8 + $0x68] sm:$0xff]
        %v716 = vld [vmem:[#allocation8 + $0x70] sm:$0xff]
        %v717 = vld [vmem:[#allocation8 + $0x78] sm:$0xff]
        %v718 = vld [vmem:[#allocation8 + $0x80] sm:$0xff]
        %v719 = vld [vmem:[#allocation8 + $0x88] sm:$0xff]
        %v720 = vld [vmem:[#allocation8 + $0x90] sm:$0xff]
        %v721 = vld [vmem:[#allocation8 + $0x98] sm:$0xff]
        %v722 = vld [vmem:[#allocation8 + $0xa0] sm:$0xff]
        %v723 = vld [vmem:[#allocation8 + $0xa8] sm:$0xff]
        %v724 = vld [vmem:[#allocation8 + $0xb0] sm:$0xff]
        %v725 = vld [vmem:[#allocation8 + $0xb8] sm:$0xff]
        %v726 = vld [vmem:[#allocation8 + $0xc0] sm:$0xff]
        %v727 = vld [vmem:[#allocation8 + $0xc8] sm:$0xff]
        %v728 = vld [vmem:[#allocation8 + $0xd0] sm:$0xff]
        %v729 = vld [vmem:[#allocation8 + $0xd8] sm:$0xff]
        %v730 = vld [vmem:[#allocation8 + $0xe0] sm:$0xff]
        %v731 = vld [vmem:[#allocation8 + $0xe8] sm:$0xff]
        %v732 = vld [vmem:[#allocation8 + $0xf0] sm:$0xff]
        %v733 = vld [vmem:[#allocation8 + $0xf8] sm:$0xff]
        %v734 = vld [vmem:[%s6] sm:$0x3]
        %v736 = vlaneseq
        %v737 = vshrl.u32 %v736, 7
        %v738 = vsub.s32 0, %v737
        %v739 = vrot.slane %v734, %v738
        %v740 = vlaneseq
        %v741 = vshrl.u32 %v740, 7
        %v742 = vsub.s32 1, %v741
        %v743 = vrot.slane %v734, %v742
        %746 = vmatprep.subr.mxu0 %v703
        %747 = vmatpush1.msra.mxu0 %v702
        %748 = vmatprep.subr.mxu0 %v705
        %749 = vmatpush1.msra.mxu0 %v704
        %750 = vmatprep.subr.mxu0 %v707
        %751 = vmatpush1.msra.mxu0 %v706
        %752 = vmatprep.subr.mxu0 %v709
        %753 = vmatpush1.msra.mxu0 %v708
        %754 = vmatprep.subr.mxu0 %v711
        %755 = vmatpush1.msra.mxu0 %v710
        %756 = vmatprep.subr.mxu0 %v713
        %757 = vmatpush1.msra.mxu0 %v712
        %758 = vmatprep.subr.mxu0 %v715
        %759 = vmatpush1.msra.mxu0 %v714
        %760 = vmatprep.subr.mxu0 %v717
        %761 = vmatpush1.msra.mxu0 %v716
        %762 = vmatprep.subr.mxu0 %v719
        %763 = vmatpush1.msra.mxu0 %v718
        %764 = vmatprep.subr.mxu0 %v721
        %765 = vmatpush1.msra.mxu0 %v720
        %766 = vmatprep.subr.mxu0 %v723
        %767 = vmatpush1.msra.mxu0 %v722
        %768 = vmatprep.subr.mxu0 %v725
        %769 = vmatpush1.msra.mxu0 %v724
        %770 = vmatprep.subr.mxu0 %v727
        %771 = vmatpush1.msra.mxu0 %v726
        %772 = vmatprep.subr.mxu0 %v729
        %773 = vmatpush1.msra.mxu0 %v728
        %774 = vmatprep.subr.mxu0 %v731
        %775 = vmatpush1.msra.mxu0 %v730
        %776 = vmatprep.subr.mxu0 %v733
        %777 = vmatpush1.msra.mxu0 %v732
        %778 = vmatprep.subr.mxu0 0.0
        %779 = vmatpush1.msra.mxu0 0.0
        %780 = vmatprep.subr.mxu0 0.0
        %781 = vmatpush1.msra.mxu0 0.0
        %782 = vmatprep.subr.mxu0 0.0
        %783 = vmatpush1.msra.mxu0 0.0
        %784 = vmatprep.subr.mxu0 0.0
        %785 = vmatpush1.msra.mxu0 0.0
        %786 = vmatprep.subr.mxu0 0.0
        %787 = vmatpush1.msra.mxu0 0.0
        %788 = vmatprep.subr.mxu0 0.0
        %789 = vmatpush1.msra.mxu0 0.0
        %790 = vmatprep.subr.mxu0 0.0
        %791 = vmatpush1.msra.mxu0 0.0
        %792 = vmatprep.subr.mxu0 0.0
        %793 = vmatpush1.msra.mxu0 0.0
        %794 = vmatprep.subr.mxu0 0.0
        %795 = vmatpush1.msra.mxu0 0.0
        %796 = vmatprep.subr.mxu0 0.0
        %797 = vmatpush1.msra.mxu0 0.0
        %798 = vmatprep.subr.mxu0 0.0
        %799 = vmatpush1.msra.mxu0 0.0
        %800 = vmatprep.subr.mxu0 0.0
        %801 = vmatpush1.msra.mxu0 0.0
        %802 = vmatprep.subr.mxu0 0.0
        %803 = vmatpush1.msra.mxu0 0.0
        %804 = vmatprep.subr.mxu0 0.0
        %805 = vmatpush1.msra.mxu0 0.0
        %806 = vmatprep.subr.mxu0 0.0
        %807 = vmatpush1.msra.mxu0 0.0
        %808 = vmatprep.subr.mxu0 0.0
        %809 = vmatpush1.msra.mxu0 0.0
        %810 = vmatprep.mubr.f32.mxu0 0.0
        %811 = vmatmul.mubr.f32.gmra.mrb[0].mxu0 %v701
        %v812 = vpop.f32.mrb[0].mxu0
        %v813 = vadd.f32 %v739, %v812
        %v814 = vpop.f32.mrb[0].mxu0
        %v815 = vadd.f32 %v743, %v814
        %816 = vdwg.mxu0
        %v817 = vmax.f32 %v813, 0.0
        %v818 = vmax.f32 %v815, 0.0
        %819 = vst [vmem:[%s379] sm:$0xff] %v817
        %820 = vst [vmem:[%s379 + $0x8] sm:$0xff] %v818
        %s821 = sand.u32 %s196, 1
        %s822 = scalar_lea.sflag [#allocation4], %s821
        %s823 = sand.u32 %s196, 1
        %s824 = smul.addr %s823, 16
        %s825 = scalar_lea.vmem [#allocation10], %s824
        %s826 = sand.u32 %s222, 1
        %s827 = scalar_lea.sflag [#allocation12], %s826
        %s828 = sand.u32 %s222, 1
        %s829 = smul.addr %s828, 8
        %s830 = scalar_lea.vmem [#allocation11], %s829
        // Predicated region
        $region65: #{tpu_custom_call.1} parent=47 // pred_check
          %p831 = pneg %p206
        $region66: #{tpu_custom_call.1} parent=47 // pred_check_branch
          %833 = sbr.rel (%p831) target = $region68
        $region67: #{tpu_custom_call.1} parent=47 // pred_region
          %s835 = ssub.s32 256, 256
          %836 = vsyncadd %s822, %s835
          %s837 = smul.addr %s31, 2
          %s838 = smul.addr %s837, 128
          %s839 = scalar_lea.hbm %s7, %s838
          %s841 = sshll.u32 %s825, 4
          %s842 = int_to_ptr.vmem [resolvable:$true] %s841
          %844 = dma.vmem_to_hbm [thread:$0]  %s842, 256, %s839, %s822
        $region68: #{tpu_custom_call.1} parent=47 // pred_fallthru
          _
        // Predicated region
        $region69: #{tpu_custom_call.1} parent=47 // pred_check
          %p845 = pneg %p232
        $region70: #{tpu_custom_call.1} parent=47 // pred_check_branch
          %847 = sbr.rel (%p845) target = $region72
        $region71: #{tpu_custom_call.1} parent=47 // pred_region
          %s849 = ssub.s32 128, 128
          %850 = vsyncadd %s827, %s849
          %s851 = smul.addr %s31, 128
          %s852 = scalar_lea.hbm %s8, %s851
          %s854 = sshll.u32 %s830, 4
          %s855 = int_to_ptr.vmem [resolvable:$true] %s854
          %857 = dma.vmem_to_hbm [thread:$0]  %s855, 128, %s852, %s827
        $region72: #{tpu_custom_call.1} parent=47 // pred_fallthru
          _
      $region48: #{tpu_custom_call.1} parent=5 // pred_fallthru
        _
      %p858 = scmp.le.s32.totalorder 2, %s26
      // Predicated region
      $region73: #{tpu_custom_call.1} parent=5 // pred_check
        %p859 = pneg %p858
      $region74: #{tpu_custom_call.1} parent=5 // pred_check_branch
        %861 = sbr.rel (%p859) target = $region76
      $region75: #{tpu_custom_call.1} parent=5 // pred_region
        %s862 = ssub.s32 %s26, 2
        // Predicated region
        $region77: #{tpu_custom_call.1} parent=75 // pred_check
          %p863 = pneg %p212
        $region78: #{tpu_custom_call.1} parent=75 // pred_check_branch
          %865 = sbr.rel (%p863) target = $region80
        $region79: #{tpu_custom_call.1} parent=75 // pred_region
          %s866 = sand.u32 %s197, 1
          %s867 = scalar_lea.sflag [#allocation4], %s866
          %s868 = sand.u32 %s197, 1
          %s869 = smul.addr %s868, 16
          %s870 = scalar_lea.vmem [#allocation10], %s869
          %871 = dma.done %s867, 256
        $region80: #{tpu_custom_call.1} parent=75 // pred_fallthru
          _
        // Predicated region
        $region81: #{tpu_custom_call.1} parent=75 // pred_check
          %p872 = pneg %p238
        $region82: #{tpu_custom_call.1} parent=75 // pred_check_branch
          %874 = sbr.rel (%p872) target = $region84
        $region83: #{tpu_custom_call.1} parent=75 // pred_region
          %s875 = sand.u32 %s223, 1
          %s876 = scalar_lea.sflag [#allocation12], %s875
          %s877 = sand.u32 %s223, 1
          %s878 = smul.addr %s877, 8
          %s879 = scalar_lea.vmem [#allocation11], %s878
          %880 = dma.done %s876, 128
        $region84: #{tpu_custom_call.1} parent=75 // pred_fallthru
          _
      $region76: #{tpu_custom_call.1} parent=5 // pred_fallthru
        _
    $region6: #{tpu_custom_call.1} parent=1 // loop_footer
      %s30 = sadd.s32 1, %s26
    $region7: #{tpu_custom_call.1} parent=1 // loop_footer_branch
      %25 = sbr.rel target = $region3
    $region8: #{tpu_custom_call.1} parent=1 // loop_exit
      _
    %881 = vsyncpa [#allocation3], 1
    %s882 = scalar_lea.sflag [#allocation3], 1
    %883 = vsyncpa %s882, 1
    %884 = vsyncpa [#allocation6], 1
    %885 = vsyncpa [#allocation9], 1
    %886 = vsyncpa [#allocation4], 1
    %s887 = scalar_lea.sflag [#allocation4], 1
    %888 = vsyncpa %s887, 1
    %889 = vsyncpa [#allocation12], 1
    %s890 = scalar_lea.sflag [#allocation12], 1
    %891 = vsyncpa %s890, 1

</llo_original>
